<compile_context>
chip_gen: v6e
topology: v6e:2x2x1
jax: 0.10.0
libtpu: 0.0.40
codegen_flags: <defaults>
</compile_context>

<pallas_src>
import functools

import jax
import jax.numpy as jnp
from jax import lax
from jax.experimental import pallas as pl
from jax.experimental.pallas import tpu as pltpu

_LANES = 128     # vreg lane width
_SUBLANES = 8    # vreg sublane count (f32)


def _bce_sum_kernel(x_ref, y_ref, out_ref, acc_ref, *,
                    n_full_rows, rem, inv_n, tile_rows):
    """One (tile_rows, 128) tile of the flattened logits/targets per grid step.

    acc_ref: (tile_rows, 128) f32 VMEM accumulator, resident across the grid
             ("arbitrary" axis).  Steady state is a pure VPU add; the XLU
             reduce + SMEM scalar store happen only in the last step.
    out_ref: (1, 1) f32 SMEM scalar output (written once, in the last step).
    """
    i = pl.program_id(0)
    last = pl.num_programs(0) - 1

    @pl.when(i == 0)
    def _init():
        acc_ref[...] = jnp.zeros_like(acc_ref)

    # In-kernel upcast: inputs arrive in their native dtype (bf16 streams half
    # the HBM bytes of a wrapper-side f32 cast).
    x = x_ref[...].astype(jnp.float32)
    y = y_ref[...].astype(jnp.float32)

    # Numerically stable BCE-with-logits (matches torch.nn.BCEWithLogitsLoss):
    #   max(x, 0) - x*y + log1p(exp(-|x|))
    loss = jnp.maximum(x, 0.0) - x * y + jnp.log(1.0 + jnp.exp(-jnp.abs(x)))

    @pl.when(i != last)
    def _accumulate():
        # All-valid tile: no masking, no reduction -- hidden under the DMA.
        acc_ref[...] += loss

    @pl.when(i == last)
    def _accumulate_masked_and_finalize():
        # Only the last tile can contain zero-padded lanes or out-of-bounds
        # (garbage) rows from a partial block, so the iota mask is paid once.
        row = i * tile_rows + lax.broadcasted_iota(jnp.int32, loss.shape, 0)
        col = lax.broadcasted_iota(jnp.int32, loss.shape, 1)
        valid = (row < n_full_rows) | ((row == n_full_rows) & (col < rem))
        acc_ref[...] += jnp.where(valid, loss, jnp.float32(0.0))
        # Single cross-lane/sublane reduce + compile-time 1/N fold.
        out_ref[0, 0] = jnp.sum(acc_ref[...]) * jnp.float32(inv_n)


def bce_loss_ack(ack: jax.Array, similarity: jax.Array, *,
                 max_tile_rows: int = 4096) -> jax.Array:
    """Pallas equivalent of BCELossAck.forward(ack, similarity) -> scalar mean loss."""
    assert ack.shape == similarity.shape
    x = ack.reshape(-1)          # (batch, 2) -> (2*batch,): free bitcast
    y = similarity.reshape(-1)

    n = x.shape[0]               # true element count (batch * 2)
    n_full_rows = n // _LANES    # rows that are fully valid
    rem = n % _LANES             # valid lanes in the (single) partial row

    if rem == 0:
        # Lane-dense reshape is a free bitcast: no pad, no extra HBM traffic.
        rows = n_full_rows
        x2d = x.reshape(rows, _LANES)
        y2d = y.reshape(rows, _LANES)
    else:
        # TODO(synk): a fully copy-free path for n % 128 != 0 needs a flat HBM
        # ref (memory_space=pl.ANY) + manual DMA; this pad costs one extra
        # read+write of the inputs (only hit when batch % 64 != 0).
        pad = _LANES - rem
        rows = n_full_rows + 1
        x2d = jnp.pad(x, (0, pad)).reshape(rows, _LANES)
        y2d = jnp.pad(y, (0, pad)).reshape(rows, _LANES)

    # Tile rows: multiple of 8 (sublane), capped at max_tile_rows.
    tile_rows = min(max_tile_rows,
                    ((rows + _SUBLANES - 1) // _SUBLANES) * _SUBLANES)
    tile_rows = max(_SUBLANES, (tile_rows // _SUBLANES) * _SUBLANES)

    grid = (pl.cdiv(rows, tile_rows),)   # last block may be partial; masked above

    kernel = functools.partial(
        _bce_sum_kernel,
        n_full_rows=n_full_rows,
        rem=rem,
        inv_n=1.0 / float(n),
        tile_rows=tile_rows,
    )

    out = pl.pallas_call(
        kernel,
        out_shape=jax.ShapeDtypeStruct((1, 1), jnp.float32),
        grid_spec=pltpu.PrefetchScalarGridSpec(
            num_scalar_prefetch=0,
            grid=grid,
            in_specs=[
                pl.BlockSpec((tile_rows, _LANES), lambda i: (i, 0)),
                pl.BlockSpec((tile_rows, _LANES), lambda i: (i, 0)),
            ],
            out_specs=pl.BlockSpec((1, 1), lambda i: (0, 0),
                                   memory_space=pltpu.MemorySpace.SMEM),
            scratch_shapes=[pltpu.VMEM((tile_rows, _LANES), jnp.float32)],
        ),
        compiler_params=pltpu.CompilerParams(
            dimension_semantics=("arbitrary",)),
    )(x2d, y2d)
    return out[0, 0]


def _reference(ack, similarity):
    x = ack.astype(jnp.float32)
    y = similarity.astype(jnp.float32)
    return jnp.mean(jnp.maximum(x, 0.0) - x * y + jnp.log(1.0 + jnp.exp(-jnp.abs(x))))


if __name__ == "__main__":
    key = jax.random.PRNGKey(0)
    k1, k2, k3, k4, k5, k6 = jax.random.split(key, 6)

    # 1) Small shape consistent with the module: [batch, 2] logits vs one-hot.
    #    n = 16 -> unaligned path (pad + single partial block, mask exercised).
    batch = 8
    ack = jax.random.normal(k1, (batch, 2), dtype=jnp.float32)
    labels = jax.random.randint(k2, (batch,), 0, 2)
    similarity = jax.nn.one_hot(labels, 2, dtype=jnp.float32)
    loss = jax.block_until_ready(bce_loss_ack(ack, similarity))
    ref = _reference(ack, similarity)
    assert jnp.allclose(loss, ref, atol=1e-5, rtol=1e-5), (loss, ref)

    # 2) Multi-step grid + unaligned tail (tiny tiles force grid > 1 and a
    #    partially valid last tile).
    batch2 = 2500  # n = 5000 -> 39 full rows + 8-lane remainder
    ack2 = jax.random.normal(k3, (batch2, 2), dtype=jnp.float32)
    labels2 = jax.random.randint(k4, (batch2,), 0, 2)
    sim2 = jax.nn.one_hot(labels2, 2, dtype=jnp.float32)
    loss2 = jax.block_until_ready(bce_loss_ack(ack2, sim2, max_tile_rows=8))
    ref2 = _reference(ack2, sim2)
    assert jnp.allclose(loss2, ref2, atol=1e-5, rtol=1e-5), (loss2, ref2)

    # 3) Aligned path (n % 128 == 0 -> no pad, free reshape) + in-kernel bf16
    #    upcast.
    batch3 = 256  # n = 512 -> 4 rows, single partial (8,128) block
    ack3 = jax.random.normal(k5, (batch3, 2), dtype=jnp.bfloat16)
    labels3 = jax.random.randint(k6, (batch3,), 0, 2)
    sim3 = jax.nn.one_hot(labels3, 2, dtype=jnp.bfloat16)
    loss3 = jax.block_until_ready(bce_loss_ack(ack3, sim3))
    ref3 = _reference(ack3, sim3)
    assert jnp.allclose(loss3, ref3, atol=1e-5, rtol=1e-5), (loss3, ref3)

    print("KERNEL_OK")
</pallas_src>

<mosaic_0001>
module attributes {stable_mosaic.version = 11 : i64} {
  func.func @_bce_sum_kernel(%arg0: i32, %arg1: memref<8x128xf32, #tpu.memory_space<vmem>>, %arg2: memref<8x128xf32, #tpu.memory_space<vmem>>, %arg3: memref<1x1xf32, #tpu.memory_space<smem>>, %arg4: memref<8x128xf32, #tpu.memory_space<vmem>>) attributes {dimension_semantics = [#tpu.dimension_semantics<arbitrary>], iteration_bounds = array<i64: 1>, scalar_prefetch = 0 : i64, scratch_operands = 1 : i64, tpu.core_type = #tpu.core_type<tc>, window_params = [{transform_indices = @transform_0, window_bounds = array<i64: 8, 128>}, {transform_indices = @transform_1, window_bounds = array<i64: 8, 128>}, {transform_indices = @transform_2, window_bounds = array<i64: 1, 1>}]} {
    %c0_i32 = arith.constant 0 : i32
    %0 = arith.cmpi eq, %arg0, %c0_i32 : i32
    %1 = arith.extui %0 : i1 to i32
    %c0_i32_0 = arith.constant 0 : i32
    %2 = arith.cmpi ne, %1, %c0_i32_0 : i32
    scf.if %2 {
      %cst_10 = arith.constant 0.000000e+00 : f32
      %23 = vector.broadcast %cst_10 : f32 to vector<8x128xf32>
      %c0_11 = arith.constant 0 : index
      %c0_12 = arith.constant 0 : index
      %24 = vector.load %arg4[%c0_11, %c0_12] : memref<8x128xf32, #tpu.memory_space<vmem>>, vector<8x128xf32>
      tpu.vector_store %arg4[%c0_11, %c0_12], %23 {strides = array<i32>} : memref<8x128xf32, #tpu.memory_space<vmem>>, vector<8x128xf32>,
    } else {
    }
    %c0 = arith.constant 0 : index
    %c0_1 = arith.constant 0 : index
    %3 = vector.load %arg1[%c0, %c0_1] : memref<8x128xf32, #tpu.memory_space<vmem>>, vector<8x128xf32>
    %c0_2 = arith.constant 0 : index
    %c0_3 = arith.constant 0 : index
    %4 = vector.load %arg2[%c0_2, %c0_3] : memref<8x128xf32, #tpu.memory_space<vmem>>, vector<8x128xf32>
    %cst = arith.constant 0.000000e+00 : f32
    %5 = vector.broadcast %cst : f32 to vector<8x128xf32>
    %6 = arith.maximumf %3, %5 : vector<8x128xf32>
    %7 = arith.mulf %3, %4 : vector<8x128xf32>
    %8 = arith.subf %6, %7 : vector<8x128xf32>
    %9 = math.absf %3 : vector<8x128xf32>
    %cst_4 = arith.constant 0.000000e+00 : f32
    %10 = vector.broadcast %cst_4 : f32 to vector<8x128xf32>
    %11 = arith.subf %10, %9 : vector<8x128xf32>
    %12 = math.exp %11 : vector<8x128xf32>
    %cst_5 = arith.constant 1.000000e+00 : f32
    %13 = vector.broadcast %cst_5 : f32 to vector<8x128xf32>
    %14 = arith.addf %13, %12 : vector<8x128xf32>
    %15 = math.log %14 : vector<8x128xf32>
    %16 = arith.addf %8, %15 : vector<8x128xf32>
    %c0_i32_6 = arith.constant 0 : i32
    %17 = arith.cmpi ne, %arg0, %c0_i32_6 : i32
    %18 = arith.extui %17 : i1 to i32
    %c0_i32_7 = arith.constant 0 : i32
    %19 = arith.cmpi ne, %18, %c0_i32_7 : i32
    scf.if %19 {
      %c0_10 = arith.constant 0 : index
      %c0_11 = arith.constant 0 : index
      %23 = vector.load %arg4[%c0_10, %c0_11] : memref<8x128xf32, #tpu.memory_space<vmem>>, vector<8x128xf32>
      %24 = arith.addf %23, %16 : vector<8x128xf32>
      %c0_12 = arith.constant 0 : index
      %c0_13 = arith.constant 0 : index
      %25 = vector.load %arg4[%c0_12, %c0_13] : memref<8x128xf32, #tpu.memory_space<vmem>>, vector<8x128xf32>
      tpu.vector_store %arg4[%c0_12, %c0_13], %24 {strides = array<i32>} : memref<8x128xf32, #tpu.memory_space<vmem>>, vector<8x128xf32>,
    } else {
    }
    %c0_i32_8 = arith.constant 0 : i32
    %20 = arith.cmpi eq, %arg0, %c0_i32_8 : i32
    %21 = arith.extui %20 : i1 to i32
    %c0_i32_9 = arith.constant 0 : i32
    %22 = arith.cmpi ne, %21, %c0_i32_9 : i32
    scf.if %22 {
      %c8_i32 = arith.constant 8 : i32
      %23 = arith.muli %arg0, %c8_i32 : i32
      %24 = tpu.iota {dimensions = array<i32: 0>} : vector<8x128xi32>
      %25 = vector.broadcast %23 : i32 to vector<8x128xi32>
      %26 = arith.addi %25, %24 : vector<8x128xi32>
      %27 = tpu.iota {dimensions = array<i32: 1>} : vector<8x128xi32>
      %c0_i32_10 = arith.constant 0 : i32
      %28 = vector.broadcast %c0_i32_10 : i32 to vector<8x128xi32>
      %29 = arith.cmpi slt, %26, %28 : vector<8x128xi32>
      %c0_i32_11 = arith.constant 0 : i32
      %30 = vector.broadcast %c0_i32_11 : i32 to vector<8x128xi32>
      %31 = arith.cmpi eq, %26, %30 : vector<8x128xi32>
      %c16_i32 = arith.constant 16 : i32
      %32 = vector.broadcast %c16_i32 : i32 to vector<8x128xi32>
      %33 = arith.cmpi slt, %27, %32 : vector<8x128xi32>
      %34 = arith.andi %31, %33 : vector<8x128xi1>
      %35 = arith.ori %29, %34 : vector<8x128xi1>
      %c0_12 = arith.constant 0 : index
      %c0_13 = arith.constant 0 : index
      %36 = vector.load %arg4[%c0_12, %c0_13] : memref<8x128xf32, #tpu.memory_space<vmem>>, vector<8x128xf32>
      %cst_14 = arith.constant 0.000000e+00 : f32
      %37 = vector.broadcast %cst_14 : f32 to vector<8x128xf32>
      %38 = arith.select %35, %16, %37 : vector<8x128xi1>, vector<8x128xf32>
      %39 = arith.addf %36, %38 : vector<8x128xf32>
      %c0_15 = arith.constant 0 : index
      %c0_16 = arith.constant 0 : index
      %40 = vector.load %arg4[%c0_15, %c0_16] : memref<8x128xf32, #tpu.memory_space<vmem>>, vector<8x128xf32>
      tpu.vector_store %arg4[%c0_15, %c0_16], %39 {strides = array<i32>} : memref<8x128xf32, #tpu.memory_space<vmem>>, vector<8x128xf32>,
      %c0_17 = arith.constant 0 : index
      %c0_18 = arith.constant 0 : index
      %41 = vector.load %arg4[%c0_17, %c0_18] : memref<8x128xf32, #tpu.memory_space<vmem>>, vector<8x128xf32>
      %42 = vector.shape_cast %41 : vector<8x128xf32> to vector<1x8x128xf32>
      %cst_19 = arith.constant dense<0.000000e+00> : vector<1xf32>
      %43 = vector.multi_reduction <add>, %42, %cst_19 [1, 2] : vector<1x8x128xf32> to vector<1xf32>
      %44 = vector.shape_cast %43 : vector<1xf32> to vector<1x1x1xf32>
      %45 = vector.extract %44[0, 0, 0] : f32 from vector<1x1x1xf32>
      %cst_20 = arith.constant 6.250000e-02 : f32
      %46 = arith.mulf %45, %cst_20 : f32
      %c0_21 = arith.constant 0 : index
      %c0_22 = arith.constant 0 : index
      %47 = memref.load %arg3[%c0_21, %c0_22] : memref<1x1xf32, #tpu.memory_space<smem>>
      memref.store %46, %arg3[%c0_21, %c0_22] : memref<1x1xf32, #tpu.memory_space<smem>>
    } else {
    }
    return
  }
  func.func @transform_0(%arg0: i32) -> (i32, i32) {
    %c0_i32 = arith.constant 0 : i32
    %c0_i32_0 = arith.constant 0 : i32
    return %arg0, %c0_i32 : i32, i32
  }
  func.func @transform_1(%arg0: i32) -> (i32, i32) {
    %c0_i32 = arith.constant 0 : i32
    %c0_i32_0 = arith.constant 0 : i32
    return %arg0, %c0_i32 : i32, i32
  }
  func.func @transform_2(%arg0: i32) -> (i32, i32) {
    %c0_i32 = arith.constant 0 : i32
    %c0_i32_0 = arith.constant 0 : i32
    %c0_i32_1 = arith.constant 0 : i32
    return %c0_i32, %c0_i32_0 : i32, i32
  }
}

</mosaic_0001>

<llo_original>
// kernel: tpu_custom_call.1
$region0: #{tpu_custom_call.1}
  #allocation0 [shape = 'u32[]', space=smem, size = 0x4, offset = 0x4, fixed_abs, tag = 'smem constant byte address 0x4 - core index']
  #allocation1 [shape = 'u32[144,128]{1,0:T(1,128)}', space=vmem, size = 0x12000, scoped, tag = 'internal scratch']
  #allocation2 [shape = 'f32[8,128]{1,0:T(8,128)}', space=vmem, size = 0x1000, scoped, tag = 'scratch operand']
  %s0 = inlined_call_operand.hbm [shape: f32[1,128], index: 0, kind: input, shape index: {}]
  %s1 = inlined_call_operand.vmem [shape: f32[1,128], index: 1, kind: input, shape index: {}]
  %s2 = inlined_call_operand.hbm [shape: f32[1,1], index: 2, kind: output, shape index: {}]
  %s3 = sld [smem:[#allocation0]]
  $region34: #{tpu_custom_call.1} parent=0
    _
  %s5 = ssub.s32 1, %s3
  %s6 = scalar_select 0, %s5, %s3
  $region1: #{tpu_custom_call.1} parent=0
    #allocation3 [shape = 'u8[4096]{0}', space=vmem, size = 0x1000, scoped, tag = 'input window, operand 0, single buffered']
    #allocation4 [shape = 's32[1]{0}', space=sflag, size = 0x4, scoped, tag = 'scoped memory for tpu_custom_call.1']
    #allocation5 [shape = 's32[1]{0}', space=sflag, size = 0x4, scoped, tag = 'scoped memory for tpu_custom_call.1']
    #allocation6 [shape = 'u8[512]{0}', space=smem, size = 0x200, scoped, tag = 'output window, operand 0, single buffered']
    %7 = vsyncpa [#allocation4], 0
    %8 = vsyncpa [#allocation5], 0
    // Predicated region
    $region2: #{tpu_custom_call.1} parent=1 // pred_check
      _
    $region3: #{tpu_custom_call.1} parent=1 // pred_check_branch
      %10 = sbr.rel (0) target = $region5
    $region4: #{tpu_custom_call.1} parent=1 // pred_region
      %s12 = ssub.s32 128, 16
      %13 = vsyncadd [#allocation4], %s12
      %s14 = sshll.u32 [#allocation3], 4
      %s15 = int_to_ptr.vmem [resolvable:$true] %s14
      %20 = dma.hbm_to_vmem [thread:$0]  %s0, 16, %s15, [#allocation4], 16, 16, 1
    $region5: #{tpu_custom_call.1} parent=1 // pred_fallthru
      _
    // Predicated region
    $region6: #{tpu_custom_call.1} parent=1 // pred_check
      _
    $region7: #{tpu_custom_call.1} parent=1 // pred_check_branch
      %22 = sbr.rel (0) target = $region9
    $region8: #{tpu_custom_call.1} parent=1 // pred_region
      _
    $region9: #{tpu_custom_call.1} parent=1 // pred_fallthru
      _
    // Predicated region
    $region10: #{tpu_custom_call.1} parent=1 // pred_check
      _
    $region11: #{tpu_custom_call.1} parent=1 // pred_check_branch
      %24 = sbr.rel (0) target = $region13
    $region12: #{tpu_custom_call.1} parent=1 // pred_region
      %25 = dma.done [#allocation4], 128
    $region13: #{tpu_custom_call.1} parent=1 // pred_fallthru
      _
    %p26 = scmp.eq.s32.totalorder 0, 0
    // Predicated region
    $region14: #{tpu_custom_call.1} parent=1 // pred_check
      %p27 = pneg %p26
    $region15: #{tpu_custom_call.1} parent=1 // pred_check_branch
      %29 = sbr.rel (%p27) target = $region17
    $region16: #{tpu_custom_call.1} parent=1 // pred_region
      %30 = vst [vmem:[#allocation2] sm:$0xff] 0.0
    $region17: #{tpu_custom_call.1} parent=1 // pred_fallthru
      _
    %v31 = vld [vmem:[#allocation3] sm:$0xff]
    %v32 = vld [vmem:[%s1] sm:$0xff]
    %v33 = vmax.f32 %v31, 0.0
    %v34 = vmul.f32 %v31, %v32
    %v35 = vsub.f32 %v33, %v34
    %v36 = vand.u32 2147483647, %v31
    %v37 = vsub.f32 0.0, %v36
    %v38 = vmul.f32 %v37, 1.442695
    %v39 = vpow.pop %v38
    %v40 = vadd.f32 %v39, 1.0
    %v41 = vlog2.pop %v40
    %v42 = vmul.f32 %v41, 0.6931472
    %v43 = vadd.f32 %v35, %v42
    %p44 = scmp.ne.s32.totalorder 0, 0
    // Predicated region
    $region18: #{tpu_custom_call.1} parent=1 // pred_check
      %p45 = pneg %p44
    $region19: #{tpu_custom_call.1} parent=1 // pred_check_branch
      %47 = sbr.rel (%p45) target = $region21
    $region20: #{tpu_custom_call.1} parent=1 // pred_region
      %v48 = vld [vmem:[#allocation2] sm:$0xff]
      %v49 = vadd.f32 %v48, %v43
      %50 = vst [vmem:[#allocation2] sm:$0xff] %v49
    $region21: #{tpu_custom_call.1} parent=1 // pred_fallthru
      _
    // Predicated region
    $region22: #{tpu_custom_call.1} parent=1 // pred_check
      %p51 = pneg %p26
    $region23: #{tpu_custom_call.1} parent=1 // pred_check_branch
      %53 = sbr.rel (%p51) target = $region25
    $region24: #{tpu_custom_call.1} parent=1 // pred_region
      %s54 = smul.u32 0, 8
      %v55 = vlaneseq
      %v56 = vshrl.u32 %v55, 7
      %v57 = vstv %s54
      %v58 = vadd.s32 %v57, %v56
      %v59 = vlaneseq
      %v60 = vand.u32 %v59, 127
      %vm61 = vcmp.lt.s32.totalorder %v58, 0
      %vm62 = vcmp.eq.s32.totalorder %v58, 0
      %vm63 = vcmp.lt.s32.totalorder %v60, 16
      %vm64 = vmand %vm62, %vm63
      %vm65 = vmor %vm61, %vm64
      %v66 = vld [vmem:[#allocation2] sm:$0xff]
      %v67 = vsel %vm65, %v43, 0.0
      %v68 = vadd.f32 %v66, %v67
      %69 = vst [vmem:[#allocation2] sm:$0xff] %v68
      %v70 = vld [vmem:[#allocation2] sm:$0xff]
      %71 = vadd.xlane.f32.xlu0 %v70
      %v72 = vpop.xlane.xlu0 %71
      %v73 = vrot.slane %v72, 4
      %v74 = vadd.f32 %v72, %v73
      %v75 = vrot.slane %v74, 2
      %v76 = vadd.f32 %v74, %v75
      %v77 = vrot.slane %v76, 1
      %v78 = vadd.f32 %v76, %v77
      %s79 = vtos %v78
      %s80 = smul.f32 %s79, 0.0625
      %s81 = scalar_lea.smem [#allocation6], 0
      %82 = sst [smem:[%s81]] %s80
    $region25: #{tpu_custom_call.1} parent=1 // pred_fallthru
      _
    // Predicated region
    $region26: #{tpu_custom_call.1} parent=1 // pred_check
      _
    $region27: #{tpu_custom_call.1} parent=1 // pred_check_branch
      %84 = sbr.rel (0) target = $region29
    $region28: #{tpu_custom_call.1} parent=1 // pred_region
      %s86 = ssub.s32 16, 16
      %87 = vsyncadd [#allocation5], %s86
      %90 = dma.smem_to_hbm [#allocation6], 16, %s2, [#allocation5]
    $region29: #{tpu_custom_call.1} parent=1 // pred_fallthru
      _
    // Predicated region
    $region30: #{tpu_custom_call.1} parent=1 // pred_check
      _
    $region31: #{tpu_custom_call.1} parent=1 // pred_check_branch
      %92 = sbr.rel (0) target = $region33
    $region32: #{tpu_custom_call.1} parent=1 // pred_region
      %93 = dma.done [#allocation5], 16
    $region33: #{tpu_custom_call.1} parent=1 // pred_fallthru
      _
    %94 = sfence
    %95 = vsyncpa [#allocation4], 1
    %96 = vsyncpa [#allocation5], 1

</llo_original>
